<compile_context>
chip_gen: v5e
topology: v5e:2x2
jax: 0.10.0
libtpu: 0.0.40
codegen_flags: <defaults>
</compile_context>

<pallas_src>
import functools
import math

import jax
import jax.numpy as jnp
from jax import lax
from jax.experimental import pallas as pl
from jax.experimental.pallas import tpu as pltpu


# ---------------------------------------------------------------------------
# Kernel 1: fused Q/K/V input projections  (x @ W + b, three streams at once)
# ---------------------------------------------------------------------------
def _qkv_proj_kernel(q_ref, k_ref, v_ref,
                     wq_ref, bq_ref, wk_ref, bk_ref, wv_ref, bv_ref,
                     qp_ref, kp_ref, vp_ref):
    qp_ref[0] = (jnp.dot(q_ref[0], wq_ref[...],
                         preferred_element_type=jnp.float32)
                 + bq_ref[...]).astype(qp_ref.dtype)
    kp_ref[0] = (jnp.dot(k_ref[0], wk_ref[...],
                         preferred_element_type=jnp.float32)
                 + bk_ref[...]).astype(kp_ref.dtype)
    vp_ref[0] = (jnp.dot(v_ref[0], wv_ref[...],
                         preferred_element_type=jnp.float32)
                 + bv_ref[...]).astype(vp_ref.dtype)


# ---------------------------------------------------------------------------
# Kernel 2: scaled dot-product attention for one (batch, head, q-tile)
# ---------------------------------------------------------------------------
def _attention_kernel(q_ref, k_ref, v_ref, mask_ref, attn_ref, ctx_ref, *,
                      scale):
    qh = q_ref[0, 0]          # (Tq, Dh)
    kh = k_ref[0, 0]          # (S,  Dh)
    vh = v_ref[0, 0]          # (S,  Dh)
    m = mask_ref[0, 0]        # (Tq, S)

    # QK^T without an explicit transpose: contract the last axes on the MXU.
    scores = lax.dot_general(qh, kh, (((1,), (1,)), ((), ())),
                             preferred_element_type=jnp.float32) * scale
    scores = jnp.where(m == 0, jnp.float32(-1e9), scores)

    # Numerically-stable softmax; divide replaced by EUP approx reciprocal.
    smax = jnp.max(scores, axis=-1, keepdims=True)
    e = jnp.exp(scores - smax)
    denom = jnp.sum(e, axis=-1, keepdims=True)
    w = e * pl.reciprocal(denom, approx=True)

    attn_ref[0, 0] = w.astype(attn_ref.dtype)
    ctx_ref[0, 0] = jnp.dot(w.astype(vh.dtype), vh,
                            preferred_element_type=jnp.float32
                            ).astype(ctx_ref.dtype)


# ---------------------------------------------------------------------------
# Kernel 3: merge heads + output projection (head axis = in-kernel reduction)
#   out[b, qtile] = sum_h ctx[b, h, qtile] @ W_o[h*Dh:(h+1)*Dh, :] + b_o
# ---------------------------------------------------------------------------
def _out_proj_kernel(ctx_ref, wo_ref, bo_ref, out_ref, acc_ref):
    h = pl.program_id(2)

    @pl.when(h == 0)
    def _():
        acc_ref[...] = jnp.zeros_like(acc_ref)

    acc_ref[...] += jnp.dot(ctx_ref[0, 0], wo_ref[...],
                            preferred_element_type=jnp.float32)

    @pl.when(h == pl.num_programs(2) - 1)
    def _():
        out_ref[0] = (acc_ref[...] + bo_ref[...]).astype(out_ref.dtype)


# ---------------------------------------------------------------------------
# Wrapper
# ---------------------------------------------------------------------------
def _pick_tile(n, cap=128):
    """Largest divisor of n that is <= cap and a multiple of 8, else n."""
    if n <= cap:
        return n
    for t in range(cap, 7, -8):
        if n % t == 0:
            return t
    return n


def multihead_attention(q, k, v, params, mask=None, *, num_heads,
                        average_attention=False):
    B, S, E = q.shape
    assert E % num_heads == 0, "embed_dim must be divisible by num_heads"
    Dh = E // num_heads
    wq, bq, wk, bk, wv, bv, wo, bo = params
    if mask is None:
        mask = jnp.ones((B, 1, S, S), q.dtype)

    Tq = _pick_tile(S)
    n_q = S // Tq

    # ---- 1) fused input projections, tiled over (batch, row tiles) ---------
    x_spec = pl.BlockSpec((1, Tq, E), lambda b, i: (b, i, 0))
    w_spec = pl.BlockSpec((E, E), lambda b, i: (0, 0))
    b_spec = pl.BlockSpec((1, E), lambda b, i: (0, 0))

    Qp, Kp, Vp = pl.pallas_call(
        _qkv_proj_kernel,
        out_shape=(jax.ShapeDtypeStruct((B, S, E), q.dtype),) * 3,
        grid_spec=pltpu.PrefetchScalarGridSpec(
            num_scalar_prefetch=0,
            grid=(B, n_q),
            in_specs=[x_spec, x_spec, x_spec,
                      w_spec, b_spec, w_spec, b_spec, w_spec, b_spec],
            out_specs=[x_spec, x_spec, x_spec],
        ),
        compiler_params=pltpu.CompilerParams(
            dimension_semantics=("parallel", "parallel")),
    )(q, k, v, wq, bq, wk, bk, wv, bv)

    # split heads outside the kernel (matches the module's split_heads view)
    def split(x):
        return x.reshape(B, S, num_heads, Dh).transpose(0, 2, 1, 3)

    Qh, Kh, Vh = split(Qp), split(Kp), split(Vp)   # (B, H, S, Dh)

    # ---- 2) attention, gridded over (batch, head, q-tile) ------------------
    attn_kernel = functools.partial(_attention_kernel,
                                    scale=1.0 / math.sqrt(Dh))

    attn, ctx = pl.pallas_call(
        attn_kernel,
        out_shape=(
            jax.ShapeDtypeStruct((B, num_heads, S, S), q.dtype),
            jax.ShapeDtypeStruct((B, num_heads, S, Dh), q.dtype),
        ),
        grid_spec=pltpu.PrefetchScalarGridSpec(
            num_scalar_prefetch=0,
            grid=(B, num_heads, n_q),
            in_specs=[
                pl.BlockSpec((1, 1, Tq, Dh), lambda b, h, i: (b, h, i, 0)),
                pl.BlockSpec((1, 1, S, Dh), lambda b, h, i: (b, h, 0, 0)),
                pl.BlockSpec((1, 1, S, Dh), lambda b, h, i: (b, h, 0, 0)),
                pl.BlockSpec((1, 1, Tq, S), lambda b, h, i: (b, 0, i, 0)),
            ],
            out_specs=[
                pl.BlockSpec((1, 1, Tq, S), lambda b, h, i: (b, h, i, 0)),
                pl.BlockSpec((1, 1, Tq, Dh), lambda b, h, i: (b, h, i, 0)),
            ],
        ),
        compiler_params=pltpu.CompilerParams(
            dimension_semantics=("parallel", "parallel", "parallel")),
    )(Qh, Kh, Vh, mask)

    # ---- 3) merge heads + output projection (head axis reduced in-kernel) --
    out = pl.pallas_call(
        _out_proj_kernel,
        out_shape=jax.ShapeDtypeStruct((B, S, E), q.dtype),
        grid_spec=pltpu.PrefetchScalarGridSpec(
            num_scalar_prefetch=0,
            grid=(B, n_q, num_heads),
            in_specs=[
                pl.BlockSpec((1, 1, Tq, Dh), lambda b, i, h: (b, h, i, 0)),
                pl.BlockSpec((Dh, E), lambda b, i, h: (h, 0)),
                pl.BlockSpec((1, E), lambda b, i, h: (0, 0)),
            ],
            out_specs=pl.BlockSpec((1, Tq, E), lambda b, i, h: (b, i, 0)),
            scratch_shapes=[pltpu.VMEM((Tq, E), jnp.float32)],
        ),
        compiler_params=pltpu.CompilerParams(
            dimension_semantics=("parallel", "parallel", "arbitrary")),
    )(ctx, wo, bo)

    if average_attention:
        attn = attn.mean(axis=1)
    return out, attn


# ---------------------------------------------------------------------------
# Pure-JAX reference mirroring the PyTorch module, for validation
# ---------------------------------------------------------------------------
def _reference(q, k, v, params, mask, num_heads):
    wq, bq, wk, bk, wv, bv, wo, bo = params
    B, S, E = q.shape
    Dh = E // num_heads

    def split(x):
        return x.reshape(B, S, num_heads, Dh).transpose(0, 2, 1, 3)

    Q = split(q @ wq + bq)
    K = split(k @ wk + bk)
    V = split(v @ wv + bv)
    scores = jnp.einsum('bhqd,bhkd->bhqk', Q, K) / jnp.sqrt(jnp.float32(Dh))
    scores = jnp.where(mask == 0, -1e9, scores)
    w = jax.nn.softmax(scores, axis=-1)
    o = jnp.einsum('bhqk,bhkd->bhqd', w, V)
    o = o.transpose(0, 2, 1, 3).reshape(B, S, E)
    return o @ wo + bo, w


if __name__ == "__main__":
    B, S, E, H = 2, 8, 32, 4

    key = jax.random.PRNGKey(0)
    keys = jax.random.split(key, 12)

    # Weights stored as (in, out) = transpose of PyTorch nn.Linear layout;
    # biases as (1, E).
    def w_init(kk):
        return jax.random.normal(kk, (E, E), jnp.float32) * 0.05

    def b_init(kk):
        return jax.random.normal(kk, (1, E), jnp.float32) * 0.01

    params = (w_init(keys[0]), b_init(keys[1]),
              w_init(keys[2]), b_init(keys[3]),
              w_init(keys[4]), b_init(keys[5]),
              w_init(keys[6]), b_init(keys[7]))

    q = jax.random.normal(keys[8], (B, S, E), jnp.float32)
    k = jax.random.normal(keys[9], (B, S, E), jnp.float32)
    v = jax.random.normal(keys[10], (B, S, E), jnp.float32)

    # Mask: keep most positions, mask out the last key position for batch 0.
    mask = jnp.ones((B, 1, S, S), jnp.float32)
    mask = mask.at[0, 0, :, -1].set(0.0)

    out, attn = multihead_attention(q, k, v, params, mask, num_heads=H,
                                    average_attention=False)
    out = jax.block_until_ready(out)
    attn = jax.block_until_ready(attn)

    out_ref, attn_ref = _reference(q, k, v, params, mask, H)
    assert out.shape == (B, S, E)
    assert attn.shape == (B, H, S, S)
    # Tolerances account for the EUP approximate-reciprocal softmax denom.
    assert jnp.allclose(out, out_ref, atol=2e-3, rtol=2e-3)
    assert jnp.allclose(attn, attn_ref, atol=2e-3, rtol=2e-3)

    # Also exercise the head-averaged path.
    out_avg, attn_avg = multihead_attention(q, k, v, params, mask,
                                            num_heads=H,
                                            average_attention=True)
    out_avg = jax.block_until_ready(out_avg)
    attn_avg = jax.block_until_ready(attn_avg)
    assert attn_avg.shape == (B, S, S)
    assert jnp.allclose(attn_avg, attn_ref.mean(axis=1), atol=2e-3, rtol=2e-3)

    print("KERNEL_OK")
</pallas_src>

<mosaic_0001>
module attributes {stable_mosaic.version = 11 : i64} {
  func.func @_qkv_proj_kernel(%arg0: i32, %arg1: i32, %arg2: memref<1x8x32xf32, #tpu.memory_space<vmem>>, %arg3: memref<1x8x32xf32, #tpu.memory_space<vmem>>, %arg4: memref<1x8x32xf32, #tpu.memory_space<vmem>>, %arg5: memref<32x32xf32, #tpu.memory_space<vmem>>, %arg6: memref<1x32xf32, #tpu.memory_space<vmem>>, %arg7: memref<32x32xf32, #tpu.memory_space<vmem>>, %arg8: memref<1x32xf32, #tpu.memory_space<vmem>>, %arg9: memref<32x32xf32, #tpu.memory_space<vmem>>, %arg10: memref<1x32xf32, #tpu.memory_space<vmem>>, %arg11: memref<1x8x32xf32, #tpu.memory_space<vmem>>, %arg12: memref<1x8x32xf32, #tpu.memory_space<vmem>>, %arg13: memref<1x8x32xf32, #tpu.memory_space<vmem>>) attributes {dimension_semantics = [#tpu.dimension_semantics<parallel>, #tpu.dimension_semantics<parallel>], iteration_bounds = array<i64: 2, 1>, scalar_prefetch = 0 : i64, scratch_operands = 0 : i64, tpu.core_type = #tpu.core_type<tc>, window_params = [{transform_indices = @transform_0, window_bounds = array<i64: 1, 8, 32>}, {transform_indices = @transform_1, window_bounds = array<i64: 1, 8, 32>}, {transform_indices = @transform_2, window_bounds = array<i64: 1, 8, 32>}, {pipeline_mode = #tpu.pipeline_mode<synchronous>, transform_indices = @transform_3, window_bounds = array<i64: 32, 32>}, {pipeline_mode = #tpu.pipeline_mode<synchronous>, transform_indices = @transform_4, window_bounds = array<i64: 1, 32>}, {pipeline_mode = #tpu.pipeline_mode<synchronous>, transform_indices = @transform_5, window_bounds = array<i64: 32, 32>}, {pipeline_mode = #tpu.pipeline_mode<synchronous>, transform_indices = @transform_6, window_bounds = array<i64: 1, 32>}, {pipeline_mode = #tpu.pipeline_mode<synchronous>, transform_indices = @transform_7, window_bounds = array<i64: 32, 32>}, {pipeline_mode = #tpu.pipeline_mode<synchronous>, transform_indices = @transform_8, window_bounds = array<i64: 1, 32>}, {transform_indices = @transform_9, window_bounds = array<i64: 1, 8, 32>}, {transform_indices = @transform_10, window_bounds = array<i64: 1, 8, 32>}, {transform_indices = @transform_11, window_bounds = array<i64: 1, 8, 32>}]} {
    %c0 = arith.constant 0 : index
    %c0_0 = arith.constant 0 : index
    %c0_1 = arith.constant 0 : index
    %0 = vector.load %arg2[%c0, %c0_0, %c0_1] : memref<1x8x32xf32, #tpu.memory_space<vmem>>, vector<1x8x32xf32>
    %1 = vector.shape_cast %0 : vector<1x8x32xf32> to vector<8x32xf32>
    %c0_2 = arith.constant 0 : index
    %c0_3 = arith.constant 0 : index
    %2 = vector.load %arg5[%c0_2, %c0_3] : memref<32x32xf32, #tpu.memory_space<vmem>>, vector<32x32xf32>
    %cst = arith.constant dense<0.000000e+00> : vector<8x32xf32>
    %3 = tpu.matmul %1, %2, %cst {dimension_numbers = #tpu.dot_dimension_numbers<[1], [0], [0], [1], [0, 0, 1, 1], [], []>} : vector<8x32xf32>, vector<32x32xf32>, vector<8x32xf32> -> vector<8x32xf32>
    %c0_4 = arith.constant 0 : index
    %c0_5 = arith.constant 0 : index
    %4 = vector.load %arg6[%c0_4, %c0_5] : memref<1x32xf32, #tpu.memory_space<vmem>>, vector<1x32xf32>
    %5 = vector.broadcast %4 : vector<1x32xf32> to vector<8x32xf32>
    %6 = arith.addf %3, %5 : vector<8x32xf32>
    %c0_6 = arith.constant 0 : index
    %c0_7 = arith.constant 0 : index
    %c0_8 = arith.constant 0 : index
    %7 = vector.load %arg11[%c0_6, %c0_7, %c0_8] : memref<1x8x32xf32, #tpu.memory_space<vmem>>, vector<1x8x32xf32>
    %8 = vector.shape_cast %7 : vector<1x8x32xf32> to vector<8x32xf32>
    %9 = vector.shape_cast %6 : vector<8x32xf32> to vector<1x8x32xf32>
    tpu.vector_store %arg11[%c0_6, %c0_7, %c0_8], %9 {strides = array<i32>} : memref<1x8x32xf32, #tpu.memory_space<vmem>>, vector<1x8x32xf32>,
    %c0_9 = arith.constant 0 : index
    %c0_10 = arith.constant 0 : index
    %c0_11 = arith.constant 0 : index
    %10 = vector.load %arg3[%c0_9, %c0_10, %c0_11] : memref<1x8x32xf32, #tpu.memory_space<vmem>>, vector<1x8x32xf32>
    %11 = vector.shape_cast %10 : vector<1x8x32xf32> to vector<8x32xf32>
    %c0_12 = arith.constant 0 : index
    %c0_13 = arith.constant 0 : index
    %12 = vector.load %arg7[%c0_12, %c0_13] : memref<32x32xf32, #tpu.memory_space<vmem>>, vector<32x32xf32>
    %cst_14 = arith.constant dense<0.000000e+00> : vector<8x32xf32>
    %13 = tpu.matmul %11, %12, %cst_14 {dimension_numbers = #tpu.dot_dimension_numbers<[1], [0], [0], [1], [0, 0, 1, 1], [], []>} : vector<8x32xf32>, vector<32x32xf32>, vector<8x32xf32> -> vector<8x32xf32>
    %c0_15 = arith.constant 0 : index
    %c0_16 = arith.constant 0 : index
    %14 = vector.load %arg8[%c0_15, %c0_16] : memref<1x32xf32, #tpu.memory_space<vmem>>, vector<1x32xf32>
    %15 = vector.broadcast %14 : vector<1x32xf32> to vector<8x32xf32>
    %16 = arith.addf %13, %15 : vector<8x32xf32>
    %c0_17 = arith.constant 0 : index
    %c0_18 = arith.constant 0 : index
    %c0_19 = arith.constant 0 : index
    %17 = vector.load %arg12[%c0_17, %c0_18, %c0_19] : memref<1x8x32xf32, #tpu.memory_space<vmem>>, vector<1x8x32xf32>
    %18 = vector.shape_cast %17 : vector<1x8x32xf32> to vector<8x32xf32>
    %19 = vector.shape_cast %16 : vector<8x32xf32> to vector<1x8x32xf32>
    tpu.vector_store %arg12[%c0_17, %c0_18, %c0_19], %19 {strides = array<i32>} : memref<1x8x32xf32, #tpu.memory_space<vmem>>, vector<1x8x32xf32>,
    %c0_20 = arith.constant 0 : index
    %c0_21 = arith.constant 0 : index
    %c0_22 = arith.constant 0 : index
    %20 = vector.load %arg4[%c0_20, %c0_21, %c0_22] : memref<1x8x32xf32, #tpu.memory_space<vmem>>, vector<1x8x32xf32>
    %21 = vector.shape_cast %20 : vector<1x8x32xf32> to vector<8x32xf32>
    %c0_23 = arith.constant 0 : index
    %c0_24 = arith.constant 0 : index
    %22 = vector.load %arg9[%c0_23, %c0_24] : memref<32x32xf32, #tpu.memory_space<vmem>>, vector<32x32xf32>
    %cst_25 = arith.constant dense<0.000000e+00> : vector<8x32xf32>
    %23 = tpu.matmul %21, %22, %cst_25 {dimension_numbers = #tpu.dot_dimension_numbers<[1], [0], [0], [1], [0, 0, 1, 1], [], []>} : vector<8x32xf32>, vector<32x32xf32>, vector<8x32xf32> -> vector<8x32xf32>
    %c0_26 = arith.constant 0 : index
    %c0_27 = arith.constant 0 : index
    %24 = vector.load %arg10[%c0_26, %c0_27] : memref<1x32xf32, #tpu.memory_space<vmem>>, vector<1x32xf32>
    %25 = vector.broadcast %24 : vector<1x32xf32> to vector<8x32xf32>
    %26 = arith.addf %23, %25 : vector<8x32xf32>
    %c0_28 = arith.constant 0 : index
    %c0_29 = arith.constant 0 : index
    %c0_30 = arith.constant 0 : index
    %27 = vector.load %arg13[%c0_28, %c0_29, %c0_30] : memref<1x8x32xf32, #tpu.memory_space<vmem>>, vector<1x8x32xf32>
    %28 = vector.shape_cast %27 : vector<1x8x32xf32> to vector<8x32xf32>
    %29 = vector.shape_cast %26 : vector<8x32xf32> to vector<1x8x32xf32>
    tpu.vector_store %arg13[%c0_28, %c0_29, %c0_30], %29 {strides = array<i32>} : memref<1x8x32xf32, #tpu.memory_space<vmem>>, vector<1x8x32xf32>,
    return
  }
  func.func @transform_0(%arg0: i32, %arg1: i32) -> (i32, i32, i32) {
    %c0_i32 = arith.constant 0 : i32
    %c0_i32_0 = arith.constant 0 : i32
    return %arg0, %arg1, %c0_i32 : i32, i32, i32
  }
  func.func @transform_1(%arg0: i32, %arg1: i32) -> (i32, i32, i32) {
    %c0_i32 = arith.constant 0 : i32
    %c0_i32_0 = arith.constant 0 : i32
    return %arg0, %arg1, %c0_i32 : i32, i32, i32
  }
  func.func @transform_2(%arg0: i32, %arg1: i32) -> (i32, i32, i32) {
    %c0_i32 = arith.constant 0 : i32
    %c0_i32_0 = arith.constant 0 : i32
    return %arg0, %arg1, %c0_i32 : i32, i32, i32
  }
  func.func @transform_3(%arg0: i32, %arg1: i32) -> (i32, i32) {
    %c0_i32 = arith.constant 0 : i32
    %c0_i32_0 = arith.constant 0 : i32
    %c0_i32_1 = arith.constant 0 : i32
    return %c0_i32, %c0_i32_0 : i32, i32
  }
  func.func @transform_4(%arg0: i32, %arg1: i32) -> (i32, i32) {
    %c0_i32 = arith.constant 0 : i32
    %c0_i32_0 = arith.constant 0 : i32
    %c0_i32_1 = arith.constant 0 : i32
    return %c0_i32, %c0_i32_0 : i32, i32
  }
  func.func @transform_5(%arg0: i32, %arg1: i32) -> (i32, i32) {
    %c0_i32 = arith.constant 0 : i32
    %c0_i32_0 = arith.constant 0 : i32
    %c0_i32_1 = arith.constant 0 : i32
    return %c0_i32, %c0_i32_0 : i32, i32
  }
  func.func @transform_6(%arg0: i32, %arg1: i32) -> (i32, i32) {
    %c0_i32 = arith.constant 0 : i32
    %c0_i32_0 = arith.constant 0 : i32
    %c0_i32_1 = arith.constant 0 : i32
    return %c0_i32, %c0_i32_0 : i32, i32
  }
  func.func @transform_7(%arg0: i32, %arg1: i32) -> (i32, i32) {
    %c0_i32 = arith.constant 0 : i32
    %c0_i32_0 = arith.constant 0 : i32
    %c0_i32_1 = arith.constant 0 : i32
    return %c0_i32, %c0_i32_0 : i32, i32
  }
  func.func @transform_8(%arg0: i32, %arg1: i32) -> (i32, i32) {
    %c0_i32 = arith.constant 0 : i32
    %c0_i32_0 = arith.constant 0 : i32
    %c0_i32_1 = arith.constant 0 : i32
    return %c0_i32, %c0_i32_0 : i32, i32
  }
  func.func @transform_9(%arg0: i32, %arg1: i32) -> (i32, i32, i32) {
    %c0_i32 = arith.constant 0 : i32
    %c0_i32_0 = arith.constant 0 : i32
    return %arg0, %arg1, %c0_i32 : i32, i32, i32
  }
  func.func @transform_10(%arg0: i32, %arg1: i32) -> (i32, i32, i32) {
    %c0_i32 = arith.constant 0 : i32
    %c0_i32_0 = arith.constant 0 : i32
    return %arg0, %arg1, %c0_i32 : i32, i32, i32
  }
  func.func @transform_11(%arg0: i32, %arg1: i32) -> (i32, i32, i32) {
    %c0_i32 = arith.constant 0 : i32
    %c0_i32_0 = arith.constant 0 : i32
    return %arg0, %arg1, %c0_i32 : i32, i32, i32
  }
}

</mosaic_0001>

<llo_original>
// kernel: tpu_custom_call.1
$region0: #{tpu_custom_call.1}
  #allocation0 [shape = 'u32[]', space=smem, size = 0x4, offset = 0x4, fixed_abs, tag = 'smem constant byte address 0x4 - core index']
  #allocation1 [shape = 'u32[72,128]{1,0:T(1,128)}', space=vmem, size = 0x9000, scoped, tag = 'internal scratch']
  %s0 = inlined_call_operand.hbm [shape: f32[2,8,32], index: 0, kind: input, shape index: {}]
  %s1 = inlined_call_operand.hbm [shape: f32[2,8,32], index: 1, kind: input, shape index: {}]
  %s2 = inlined_call_operand.hbm [shape: f32[2,8,32], index: 2, kind: input, shape index: {}]
  %s3 = inlined_call_operand.hbm [shape: f32[32,32], index: 3, kind: input, shape index: {}]
  %s4 = inlined_call_operand.vmem [shape: f32[1,32], index: 4, kind: input, shape index: {}]
  %s5 = inlined_call_operand.hbm [shape: f32[32,32], index: 5, kind: input, shape index: {}]
  %s6 = inlined_call_operand.vmem [shape: f32[1,32], index: 6, kind: input, shape index: {}]
  %s7 = inlined_call_operand.hbm [shape: f32[32,32], index: 7, kind: input, shape index: {}]
  %s8 = inlined_call_operand.vmem [shape: f32[1,32], index: 8, kind: input, shape index: {}]
  %s9 = inlined_call_operand.hbm [shape: f32[2,8,32], index: 9, kind: output, shape index: {0}]
  %s10 = inlined_call_operand.hbm [shape: f32[2,8,32], index: 10, kind: output, shape index: {1}]
  %s11 = inlined_call_operand.hbm [shape: f32[2,8,32], index: 11, kind: output, shape index: {2}]
  %12 = xla_tuple %s9, %s10, %s11
  %s13 = sld [smem:[#allocation0]]
  $region109: #{tpu_custom_call.1} parent=0
    _
  %s15 = ssub.s32 1, %s13
  %s16 = scalar_select 0, %s15, %s13
  $region1: #{tpu_custom_call.1} parent=0
    #allocation2 [shape = 'u8[8192]{0}', space=vmem, size = 0x2000, scoped, tag = 'input window, operand 0']
    #allocation3 [shape = 's32[2]{0}', space=sflag, size = 0x8, scoped, tag = 'scoped memory for tpu_custom_call.1']
    #allocation4 [shape = 's32[2]{0}', space=sflag, size = 0x8, scoped, tag = 'scoped memory for tpu_custom_call.1']
    #allocation5 [shape = 'u8[8192]{0}', space=vmem, size = 0x2000, scoped, tag = 'input window, operand 1']
    #allocation6 [shape = 's32[2]{0}', space=sflag, size = 0x8, scoped, tag = 'scoped memory for tpu_custom_call.1']
    #allocation7 [shape = 'u8[8192]{0}', space=vmem, size = 0x2000, scoped, tag = 'input window, operand 2']
    #allocation8 [shape = 'u8[16384]{0}', space=vmem, size = 0x4000, scoped, tag = 'input window, operand 3, single buffered']
    #allocation9 [shape = 's32[1]{0}', space=sflag, size = 0x4, scoped, tag = 'scoped memory for tpu_custom_call.1']
    #allocation10 [shape = 'u8[16384]{0}', space=vmem, size = 0x4000, scoped, tag = 'input window, operand 5, single buffered']
    #allocation11 [shape = 'u8[16384]{0}', space=vmem, size = 0x4000, scoped, tag = 'input window, operand 7, single buffered']
    #allocation12 [shape = 's32[1]{0}', space=sflag, size = 0x4, scoped, tag = 'scoped memory for tpu_custom_call.1']
    #allocation13 [shape = 'u8[8192]{0}', space=vmem, size = 0x2000, scoped, tag = 'output window, operand 0']
    #allocation14 [shape = 'u8[8192]{0}', space=vmem, size = 0x2000, scoped, tag = 'output window, operand 1']
    #allocation15 [shape = 's32[2]{0}', space=sflag, size = 0x8, scoped, tag = 'scoped memory for tpu_custom_call.1']
    #allocation16 [shape = 'u8[8192]{0}', space=vmem, size = 0x2000, scoped, tag = 'output window, operand 2']
    %17 = vsyncpa [#allocation3], 0
    %s18 = scalar_lea.sflag [#allocation3], 1
    %19 = vsyncpa %s18, 0
    %20 = vsyncpa [#allocation6], 0
    %s21 = scalar_lea.sflag [#allocation6], 1
    %22 = vsyncpa %s21, 0
    %23 = vsyncpa [#allocation9], 0
    %24 = vsyncpa [#allocation12], 0
    %25 = vsyncpa [#allocation4], 0
    %s26 = scalar_lea.sflag [#allocation4], 1
    %27 = vsyncpa %s26, 0
    %28 = vsyncpa [#allocation15], 0
    %s29 = scalar_lea.sflag [#allocation15], 1
    %30 = vsyncpa %s29, 0
    loop: start=0, step=1, limit=4
    $region2: #{tpu_custom_call.1} parent=1 // loop_pre_header
      _
    $region3: #{tpu_custom_call.1} parent=1 // loop_header
      %s32 = sphi 0, %s36
      %p33 = scmp.ge.s32.totalorder %s32, 4
      %s39 = sphi 0, %s51
      %s40 = sphi 0, %s47
      %s41 = sphi 0, %s39
      %s42 = sphi 0, %s40
      %s43 = sphi 0, %s41
      %s44 = sphi 0, %s42
      %s56 = sphi 0, %s58
      %s59 = sphi 0, %s56
      %s60 = sphi 0, %s59
      %s76 = sphi 0, %s60
      %s84 = sphi 0, %s86
      %s87 = sphi 0, %s84
      %s88 = sphi 0, %s87
      %s104 = sphi 0, %s88
      %s112 = sphi 0, %s114
      %s115 = sphi 0, %s112
      %s116 = sphi 0, %s115
      %s132 = sphi 0, %s116
      %s136 = sphi 0, %s136
      %s138 = sphi 0, %s136
      %s139 = sphi 0, %s138
      %s153 = sphi 0, %s139
      %s157 = sphi 0, %s157
      %s159 = sphi 0, %s157
      %s160 = sphi 0, %s159
      %s174 = sphi 0, %s160
      %s178 = sphi 0, %s178
      %s180 = sphi 0, %s178
      %s181 = sphi 0, %s180
      %s195 = sphi 0, %s181
      %s199 = sphi 0, %s199
      %s201 = sphi 0, %s199
      %s202 = sphi 0, %s201
      %s216 = sphi 0, %s202
      %s220 = sphi 0, %s220
      %s222 = sphi 0, %s220
      %s223 = sphi 0, %s222
      %s237 = sphi 0, %s223
      %s241 = sphi 0, %s241
      %s243 = sphi 0, %s241
      %s244 = sphi 0, %s243
      %s258 = sphi 0, %s244
      %s266 = sphi 0, %s268
      %s269 = sphi 0, %s266
      %s270 = sphi 0, %s269
      %s286 = sphi 0, %s270
      %s294 = sphi 0, %s296
      %s297 = sphi 0, %s294
      %s298 = sphi 0, %s297
      %s314 = sphi 0, %s298
      %s322 = sphi 0, %s324
      %s325 = sphi 0, %s322
      %s326 = sphi 0, %s325
      %s342 = sphi 0, %s326
    $region4: #{tpu_custom_call.1} parent=1 // loop_header_branch
      %35 = sbr.rel (%p33) target = $region8
    $region5: #{tpu_custom_call.1} parent=1 // loop_body
      %s37 = ssub.s32 %s32, 1
      %s38 = ssub.s32 %s32, 2
      %s45 = sadd.s32 1, %s40
      %p46 = scmp.ge.s32.totalorder %s45, 1
      %s47 = scalar_select %p46, 0, %s45
      %s48 = sadd.s32 1, %s39
      %s49 = scalar_select %p46, %s48, %s39
      %p50 = scmp.ge.s32.totalorder %s49, 2
      %s51 = scalar_select %p50, 0, %s49
      %s52 = ssub.s32 %s39, %s51
      %s53 = ssub.s32 %s40, %s47
      %s54 = sor.u32 %s52, %s53
      %p55 = scmp.eq.s32.totalorder %s54, 0
      %s57 = sadd.s32 %s56, 1
      %s58 = scalar_select %p55, %s56, %s57
      %p61 = pneg %p55
      %p62 = scmp.eq.s32.totalorder %s32, 1
      %p63 = por %p61, %p62
      %p64 = scmp.ne.s32.totalorder %s56, %s59
      %p65 = scmp.eq.s32.totalorder %s32, 0
      %p66 = por %p64, %p65
      %p67 = scmp.ne.s32.totalorder %s56, %s59
      %p68 = scmp.eq.s32.totalorder %s37, 1
      %p69 = por %p67, %p68
      %p70 = scmp.ne.s32.totalorder %s59, %s60
      %p71 = scmp.eq.s32.totalorder %s37, 0
      %p72 = por %p70, %p71
      %p73 = scmp.ne.s32.totalorder %s59, %s60
      %p74 = scmp.eq.s32.totalorder %s38, 1
      %p75 = por %p73, %p74
      %p77 = scmp.ne.s32.totalorder %s60, %s76
      %p78 = scmp.eq.s32.totalorder %s38, 0
      %p79 = por %p77, %p78
      %s80 = ssub.s32 %s39, %s51
      %s81 = ssub.s32 %s40, %s47
      %s82 = sor.u32 %s80, %s81
      %p83 = scmp.eq.s32.totalorder %s82, 0
      %s85 = sadd.s32 %s84, 1
      %s86 = scalar_select %p83, %s84, %s85
      %p89 = pneg %p83
      %p90 = scmp.eq.s32.totalorder %s32, 1
      %p91 = por %p89, %p90
      %p92 = scmp.ne.s32.totalorder %s84, %s87
      %p93 = scmp.eq.s32.totalorder %s32, 0
      %p94 = por %p92, %p93
      %p95 = scmp.ne.s32.totalorder %s84, %s87
      %p96 = scmp.eq.s32.totalorder %s37, 1
      %p97 = por %p95, %p96
      %p98 = scmp.ne.s32.totalorder %s87, %s88
      %p99 = scmp.eq.s32.totalorder %s37, 0
      %p100 = por %p98, %p99
      %p101 = scmp.ne.s32.totalorder %s87, %s88
      %p102 = scmp.eq.s32.totalorder %s38, 1
      %p103 = por %p101, %p102
      %p105 = scmp.ne.s32.totalorder %s88, %s104
      %p106 = scmp.eq.s32.totalorder %s38, 0
      %p107 = por %p105, %p106
      %s108 = ssub.s32 %s39, %s51
      %s109 = ssub.s32 %s40, %s47
      %s110 = sor.u32 %s108, %s109
      %p111 = scmp.eq.s32.totalorder %s110, 0
      %s113 = sadd.s32 %s112, 1
      %s114 = scalar_select %p111, %s112, %s113
      %p117 = pneg %p111
      %p118 = scmp.eq.s32.totalorder %s32, 1
      %p119 = por %p117, %p118
      %p120 = scmp.ne.s32.totalorder %s112, %s115
      %p121 = scmp.eq.s32.totalorder %s32, 0
      %p122 = por %p120, %p121
      %p123 = scmp.ne.s32.totalorder %s112, %s115
      %p124 = scmp.eq.s32.totalorder %s37, 1
      %p125 = por %p123, %p124
      %p126 = scmp.ne.s32.totalorder %s115, %s116
      %p127 = scmp.eq.s32.totalorder %s37, 0
      %p128 = por %p126, %p127
      %p129 = scmp.ne.s32.totalorder %s115, %s116
      %p130 = scmp.eq.s32.totalorder %s38, 1
      %p131 = por %p129, %p130
      %p133 = scmp.ne.s32.totalorder %s116, %s132
      %p134 = scmp.eq.s32.totalorder %s38, 0
      %p135 = por %p133, %p134
      %s137 = sadd.s32 %s136, 1
      %p140 = scmp.eq.s32.totalorder %s32, 1
      %p141 = scmp.ne.s32.totalorder %s136, %s138
      %p142 = scmp.eq.s32.totalorder %s32, 0
      %p143 = por %p141, %p142
      %p144 = scmp.ne.s32.totalorder %s136, %s138
      %p145 = scmp.eq.s32.totalorder %s37, 1
      %p146 = por %p144, %p145
      %p147 = scmp.ne.s32.totalorder %s138, %s139
      %p148 = scmp.eq.s32.totalorder %s37, 0
      %p149 = por %p147, %p148
      %p150 = scmp.ne.s32.totalorder %s138, %s139
      %p151 = scmp.eq.s32.totalorder %s38, 1
      %p152 = por %p150, %p151
      %p154 = scmp.ne.s32.totalorder %s139, %s153
      %p155 = scmp.eq.s32.totalorder %s38, 0
      %p156 = por %p154, %p155
      %s158 = sadd.s32 %s157, 1
      %p161 = scmp.eq.s32.totalorder %s32, 1
      %p162 = scmp.ne.s32.totalorder %s157, %s159
      %p163 = scmp.eq.s32.totalorder %s32, 0
      %p164 = por %p162, %p163
      %p165 = scmp.ne.s32.totalorder %s157, %s159
      %p166 = scmp.eq.s32.totalorder %s37, 1
      %p167 = por %p165, %p166
      %p168 = scmp.ne.s32.totalorder %s159, %s160
      %p169 = scmp.eq.s32.totalorder %s37, 0
      %p170 = por %p168, %p169
      %p171 = scmp.ne.s32.totalorder %s159, %s160
      %p172 = scmp.eq.s32.totalorder %s38, 1
      %p173 = por %p171, %p172
      %p175 = scmp.ne.s32.totalorder %s160, %s174
      %p176 = scmp.eq.s32.totalorder %s38, 0
      %p177 = por %p175, %p176
      %s179 = sadd.s32 %s178, 1
      %p182 = scmp.eq.s32.totalorder %s32, 1
      %p183 = scmp.ne.s32.totalorder %s178, %s180
      %p184 = scmp.eq.s32.totalorder %s32, 0
      %p185 = por %p183, %p184
      %p186 = scmp.ne.s32.totalorder %s178, %s180
      %p187 = scmp.eq.s32.totalorder %s37, 1
      %p188 = por %p186, %p187
      %p189 = scmp.ne.s32.totalorder %s180, %s181
      %p190 = scmp.eq.s32.totalorder %s37, 0
      %p191 = por %p189, %p190
      %p192 = scmp.ne.s32.totalorder %s180, %s181
      %p193 = scmp.eq.s32.totalorder %s38, 1
      %p194 = por %p192, %p193
      %p196 = scmp.ne.s32.totalorder %s181, %s195
      %p197 = scmp.eq.s32.totalorder %s38, 0
      %p198 = por %p196, %p197
      %s200 = sadd.s32 %s199, 1
      %p203 = scmp.eq.s32.totalorder %s32, 1
      %p204 = scmp.ne.s32.totalorder %s199, %s201
      %p205 = scmp.eq.s32.totalorder %s32, 0
      %p206 = por %p204, %p205
      %p207 = scmp.ne.s32.totalorder %s199, %s201
      %p208 = scmp.eq.s32.totalorder %s37, 1
      %p209 = por %p207, %p208
      %p210 = scmp.ne.s32.totalorder %s201, %s202
      %p211 = scmp.eq.s32.totalorder %s37, 0
      %p212 = por %p210, %p211
      %p213 = scmp.ne.s32.totalorder %s201, %s202
      %p214 = scmp.eq.s32.totalorder %s38, 1
      %p215 = por %p213, %p214
      %p217 = scmp.ne.s32.totalorder %s202, %s216
      %p218 = scmp.eq.s32.totalorder %s38, 0
      %p219 = por %p217, %p218
      %s221 = sadd.s32 %s220, 1
      %p224 = scmp.eq.s32.totalorder %s32, 1
      %p225 = scmp.ne.s32.totalorder %s220, %s222
      %p226 = scmp.eq.s32.totalorder %s32, 0
      %p227 = por %p225, %p226
      %p228 = scmp.ne.s32.totalorder %s220, %s222
      %p229 = scmp.eq.s32.totalorder %s37, 1
      %p230 = por %p228, %p229
      %p231 = scmp.ne.s32.totalorder %s222, %s223
      %p232 = scmp.eq.s32.totalorder %s37, 0
      %p233 = por %p231, %p232
      %p234 = scmp.ne.s32.totalorder %s222, %s223
      %p235 = scmp.eq.s32.totalorder %s38, 1
      %p236 = por %p234, %p235
      %p238 = scmp.ne.s32.totalorder %s223, %s237
      %p239 = scmp.eq.s32.totalorder %s38, 0
      %p240 = por %p238, %p239
      %s242 = sadd.s32 %s241, 1
      %p245 = scmp.eq.s32.totalorder %s32, 1
      %p246 = scmp.ne.s32.totalorder %s241, %s243
      %p247 = scmp.eq.s32.totalorder %s32, 0
      %p248 = por %p246, %p247
      %p249 = scmp.ne.s32.totalorder %s241, %s243
      %p250 = scmp.eq.s32.totalorder %s37, 1
      %p251 = por %p249, %p250
      %p252 = scmp.ne.s32.totalorder %s243, %s244
      %p253 = scmp.eq.s32.totalorder %s37, 0
      %p254 = por %p252, %p253
      %p255 = scmp.ne.s32.totalorder %s243, %s244
      %p256 = scmp.eq.s32.totalorder %s38, 1
      %p257 = por %p255, %p256
      %p259 = scmp.ne.s32.totalorder %s244, %s258
      %p260 = scmp.eq.s32.totalorder %s38, 0
      %p261 = por %p259, %p260
      %s262 = ssub.s32 %s39, %s51
      %s263 = ssub.s32 %s40, %s47
      %s264 = sor.u32 %s262, %s263
      %p265 = scmp.eq.s32.totalorder %s264, 0
      %s267 = sadd.s32 %s266, 1
      %s268 = scalar_select %p265, %s266, %s267
      %p271 = pneg %p265
      %p272 = scmp.eq.s32.totalorder %s32, 1
      %p273 = por %p271, %p272
      %p274 = scmp.ne.s32.totalorder %s266, %s269
      %p275 = scmp.eq.s32.totalorder %s32, 0
      %p276 = por %p274, %p275
      %p277 = scmp.ne.s32.totalorder %s266, %s269
      %p278 = scmp.eq.s32.totalorder %s37, 1
      %p279 = por %p277, %p278
      %p280 = scmp.ne.s32.totalorder %s269, %s270
      %p281 = scmp.eq.s32.totalorder %s37, 0
      %p282 = por %p280, %p281
      %p283 = scmp.ne.s32.totalorder %s269, %s270
      %p284 = scmp.eq.s32.totalorder %s38, 1
      %p285 = por %p283, %p284
      %p287 = scmp.ne.s32.totalorder %s270, %s286
      %p288 = scmp.eq.s32.totalorder %s38, 0
      %p289 = por %p287, %p288
      %s290 = ssub.s32 %s39, %s51
      %s291 = ssub.s32 %s40, %s47
      %s292 = sor.u32 %s290, %s291
      %p293 = scmp.eq.s32.totalorder %s292, 0
      %s295 = sadd.s32 %s294, 1
      %s296 = scalar_select %p293, %s294, %s295
      %p299 = pneg %p293
      %p300 = scmp.eq.s32.totalorder %s32, 1
      %p301 = por %p299, %p300
      %p302 = scmp.ne.s32.totalorder %s294, %s297
      %p303 = scmp.eq.s32.totalorder %s32, 0
      %p304 = por %p302, %p303
      %p305 = scmp.ne.s32.totalorder %s294, %s297
      %p306 = scmp.eq.s32.totalorder %s37, 1
      %p307 = por %p305, %p306
      %p308 = scmp.ne.s32.totalorder %s297, %s298
      %p309 = scmp.eq.s32.totalorder %s37, 0
      %p310 = por %p308, %p309
      %p311 = scmp.ne.s32.totalorder %s297, %s298
      %p312 = scmp.eq.s32.totalorder %s38, 1
      %p313 = por %p311, %p312
      %p315 = scmp.ne.s32.totalorder %s298, %s314
      %p316 = scmp.eq.s32.totalorder %s38, 0
      %p317 = por %p315, %p316
      %s318 = ssub.s32 %s39, %s51
      %s319 = ssub.s32 %s40, %s47
      %s320 = sor.u32 %s318, %s319
      %p321 = scmp.eq.s32.totalorder %s320, 0
      %s323 = sadd.s32 %s322, 1
      %s324 = scalar_select %p321, %s322, %s323
      %p327 = pneg %p321
      %p328 = scmp.eq.s32.totalorder %s32, 1
      %p329 = por %p327, %p328
      %p330 = scmp.ne.s32.totalorder %s322, %s325
      %p331 = scmp.eq.s32.totalorder %s32, 0
      %p332 = por %p330, %p331
      %p333 = scmp.ne.s32.totalorder %s322, %s325
      %p334 = scmp.eq.s32.totalorder %s37, 1
      %p335 = por %p333, %p334
      %p336 = scmp.ne.s32.totalorder %s325, %s326
      %p337 = scmp.eq.s32.totalorder %s37, 0
      %p338 = por %p336, %p337
      %p339 = scmp.ne.s32.totalorder %s325, %s326
      %p340 = scmp.eq.s32.totalorder %s38, 1
      %p341 = por %p339, %p340
      %p343 = scmp.ne.s32.totalorder %s326, %s342
      %p344 = scmp.eq.s32.totalorder %s38, 0
      %p345 = por %p343, %p344
      %p346 = scmp.le.s32.totalorder 1, %s32
      %p347 = scmp.lt.s32.totalorder %s32, 3
      %p348 = pnand %p346, %p347
      %p349 = pneg %p348
      // Predicated region
      $region9: #{tpu_custom_call.1} parent=5 // pred_check
        _
      $region10: #{tpu_custom_call.1} parent=5 // pred_check_branch
        %351 = sbr.rel (%p348) target = $region12
      $region11: #{tpu_custom_call.1} parent=5 // pred_region
        %s352 = ssub.s32 %s32, 1
        // Predicated region
        $region13: #{tpu_custom_call.1} parent=11 // pred_check
          %p353 = pneg %p149
        $region14: #{tpu_custom_call.1} parent=11 // pred_check_branch
          %355 = sbr.rel (%p353) target = $region16
        $region15: #{tpu_custom_call.1} parent=11 // pred_region
          %357 = vsyncadd [#allocation9], 0
          %s358 = sshll.u32 %s3, 4
          %s359 = int_to_ptr.hbm [resolvable:$true] %s358
          %s360 = sshll.u32 [#allocation8], 4
          %s361 = int_to_ptr.vmem [resolvable:$true] %s360
          %366 = dma.hbm_to_vmem [thread:$0]  %s359, 512, %s361, [#allocation9], 128, 128, 8
        $region16: #{tpu_custom_call.1} parent=11 // pred_fallthru
          _
        // Predicated region
        $region17: #{tpu_custom_call.1} parent=11 // pred_check
          %p367 = pneg %p170
        $region18: #{tpu_custom_call.1} parent=11 // pred_check_branch
          %369 = sbr.rel (%p367) target = $region20
        $region19: #{tpu_custom_call.1} parent=11 // pred_region
          _
        $region20: #{tpu_custom_call.1} parent=11 // pred_fallthru
          _
        // Predicated region
        $region21: #{tpu_custom_call.1} parent=11 // pred_check
          %p370 = pneg %p191
        $region22: #{tpu_custom_call.1} parent=11 // pred_check_branch
          %372 = sbr.rel (%p370) target = $region24
        $region23: #{tpu_custom_call.1} parent=11 // pred_region
          %374 = vsyncadd [#allocation9], 0
          %s375 = sshll.u32 %s5, 4
          %s376 = int_to_ptr.hbm [resolvable:$true] %s375
          %s377 = sshll.u32 [#allocation10], 4
          %s378 = int_to_ptr.vmem [resolvable:$true] %s377
          %383 = dma.hbm_to_vmem [thread:$0]  %s376, 512, %s378, [#allocation9], 128, 128, 8
        $region24: #{tpu_custom_call.1} parent=11 // pred_fallthru
          _
        // Predicated region
        $region25: #{tpu_custom_call.1} parent=11 // pred_check
          %p384 = pneg %p212
        $region26: #{tpu_custom_call.1} parent=11 // pred_check_branch
          %386 = sbr.rel (%p384) target = $region28
        $region27: #{tpu_custom_call.1} parent=11 // pred_region
          _
        $region28: #{tpu_custom_call.1} parent=11 // pred_fallthru
          _
        // Predicated region
        $region29: #{tpu_custom_call.1} parent=11 // pred_check
          %p387 = pneg %p233
        $region30: #{tpu_custom_call.1} parent=11 // pred_check_branch
          %389 = sbr.rel (%p387) target = $region32
        $region31: #{tpu_custom_call.1} parent=11 // pred_region
          %391 = vsyncadd [#allocation12], 0
          %s392 = sshll.u32 %s7, 4
          %s393 = int_to_ptr.hbm [resolvable:$true] %s392
          %s394 = sshll.u32 [#allocation11], 4
          %s395 = int_to_ptr.vmem [resolvable:$true] %s394
          %400 = dma.hbm_to_vmem [thread:$0]  %s393, 512, %s395, [#allocation12], 128, 128, 8
        $region32: #{tpu_custom_call.1} parent=11 // pred_fallthru
          _
        // Predicated region
        $region33: #{tpu_custom_call.1} parent=11 // pred_check
          %p401 = pneg %p254
        $region34: #{tpu_custom_call.1} parent=11 // pred_check_branch
          %403 = sbr.rel (%p401) target = $region36
        $region35: #{tpu_custom_call.1} parent=11 // pred_region
          _
        $region36: #{tpu_custom_call.1} parent=11 // pred_fallthru
          _
      $region12: #{tpu_custom_call.1} parent=5 // pred_fallthru
        _
      %p404 = scmp.lt.s32.totalorder %s32, 2
      // Predicated region
      $region37: #{tpu_custom_call.1} parent=5 // pred_check
        %p405 = pneg %p404
      $region38: #{tpu_custom_call.1} parent=5 // pred_check_branch
        %407 = sbr.rel (%p405) target = $region40
      $region39: #{tpu_custom_call.1} parent=5 // pred_region
        // Predicated region
        $region41: #{tpu_custom_call.1} parent=39 // pred_check
          %p408 = pneg %p66
        $region42: #{tpu_custom_call.1} parent=39 // pred_check_branch
          %410 = sbr.rel (%p408) target = $region44
        $region43: #{tpu_custom_call.1} parent=39 // pred_region
          %s411 = sand.u32 %s56, 1
          %s412 = scalar_lea.sflag [#allocation3], %s411
          %s413 = sand.u32 %s56, 1
          %s414 = smul.addr %s413, 8
          %s415 = scalar_lea.vmem [#allocation2], %s414
          %417 = vsyncadd %s412, 0
          %s418 = sadd.s32 %s40, %s39
          %s419 = smul.addr %s418, 8
          %s420 = scalar_lea.hbm %s0, %s419
          %s422 = sshll.u32 %s420, 4
          %s423 = int_to_ptr.hbm [resolvable:$true] %s422
          %s424 = sshll.u32 %s415, 4
          %s425 = int_to_ptr.vmem [resolvable:$true] %s424
          %427 = dma.hbm_to_vmem [thread:$0]  %s423, 128, %s425, %s412
        $region44: #{tpu_custom_call.1} parent=39 // pred_fallthru
          _
        // Predicated region
        $region45: #{tpu_custom_call.1} parent=39 // pred_check
          %p428 = pneg %p94
        $region46: #{tpu_custom_call.1} parent=39 // pred_check_branch
          %430 = sbr.rel (%p428) target = $region48
        $region47: #{tpu_custom_call.1} parent=39 // pred_region
          %s431 = sand.u32 %s32, 1
          %s432 = scalar_lea.sflag [#allocation6], %s431
          %s433 = sand.u32 %s84, 1
          %s434 = smul.addr %s433, 8
          %s435 = scalar_lea.vmem [#allocation5], %s434
          %437 = vsyncadd %s432, 0
          %s438 = sadd.s32 %s40, %s39
          %s439 = smul.addr %s438, 8
          %s440 = scalar_lea.hbm %s1, %s439
          %s442 = sshll.u32 %s440, 4
          %s443 = int_to_ptr.hbm [resolvable:$true] %s442
          %s444 = sshll.u32 %s435, 4
          %s445 = int_to_ptr.vmem [resolvable:$true] %s444
          %447 = dma.hbm_to_vmem [thread:$0]  %s443, 128, %s445, %s432
        $region48: #{tpu_custom_call.1} parent=39 // pred_fallthru
          _
        // Predicated region
        $region49: #{tpu_custom_call.1} parent=39 // pred_check
          %p448 = pneg %p122
        $region50: #{tpu_custom_call.1} parent=39 // pred_check_branch
          %450 = sbr.rel (%p448) target = $region52
        $region51: #{tpu_custom_call.1} parent=39 // pred_region
          %s451 = sand.u32 %s32, 1
          %s452 = scalar_lea.sflag [#allocation6], %s451
          %s453 = sand.u32 %s112, 1
          %s454 = smul.addr %s453, 8
          %s455 = scalar_lea.vmem [#allocation7], %s454
          %457 = vsyncadd %s452, 0
          %s458 = sadd.s32 %s40, %s39
          %s459 = smul.addr %s458, 8
          %s460 = scalar_lea.hbm %s2, %s459
          %s462 = sshll.u32 %s460, 4
          %s463 = int_to_ptr.hbm [resolvable:$true] %s462
          %s464 = sshll.u32 %s455, 4
          %s465 = int_to_ptr.vmem [resolvable:$true] %s464
          %467 = dma.hbm_to_vmem [thread:$0]  %s463, 128, %s465, %s452
        $region52: #{tpu_custom_call.1} parent=39 // pred_fallthru
          _
      $region40: #{tpu_custom_call.1} parent=5 // pred_fallthru
        _
      %p468 = scmp.le.s32.totalorder 1, %s32
      %p469 = scmp.lt.s32.totalorder %s32, 3
      %p470 = pnand %p468, %p469
      %p471 = pneg %p470
      // Predicated region
      $region53: #{tpu_custom_call.1} parent=5 // pred_check
        _
      $region54: #{tpu_custom_call.1} parent=5 // pred_check_branch
        %473 = sbr.rel (%p470) target = $region56
      $region55: #{tpu_custom_call.1} parent=5 // pred_region
        %s474 = ssub.s32 %s32, 1
        %s475 = sand.u32 %s59, 1
        %s476 = scalar_lea.sflag [#allocation3], %s475
        %s477 = sand.u32 %s59, 1
        %s478 = smul.addr %s477, 8
        %s479 = scalar_lea.vmem [#allocation2], %s478
        // Predicated region
        $region57: #{tpu_custom_call.1} parent=55 // pred_check
          %p480 = pneg %p72
        $region58: #{tpu_custom_call.1} parent=55 // pred_check_branch
          %482 = sbr.rel (%p480) target = $region60
        $region59: #{tpu_custom_call.1} parent=55 // pred_region
          %484 = dma.done %s476, 128
        $region60: #{tpu_custom_call.1} parent=55 // pred_fallthru
          _
        %s485 = sand.u32 %s37, 1
        %s486 = scalar_lea.sflag [#allocation6], %s485
        %s487 = sand.u32 %s87, 1
        %s488 = smul.addr %s487, 8
        %s489 = scalar_lea.vmem [#allocation5], %s488
        // Predicated region
        $region61: #{tpu_custom_call.1} parent=55 // pred_check
          %p490 = pneg %p100
        $region62: #{tpu_custom_call.1} parent=55 // pred_check_branch
          %492 = sbr.rel (%p490) target = $region64
        $region63: #{tpu_custom_call.1} parent=55 // pred_region
          %494 = dma.done %s486, 128
        $region64: #{tpu_custom_call.1} parent=55 // pred_fallthru
          _
        %s495 = sand.u32 %s37, 1
        %s496 = scalar_lea.sflag [#allocation6], %s495
        %s497 = sand.u32 %s115, 1
        %s498 = smul.addr %s497, 8
        %s499 = scalar_lea.vmem [#allocation7], %s498
        // Predicated region
        $region65: #{tpu_custom_call.1} parent=55 // pred_check
          %p500 = pneg %p128
        $region66: #{tpu_custom_call.1} parent=55 // pred_check_branch
          %502 = sbr.rel (%p500) target = $region68
        $region67: #{tpu_custom_call.1} parent=55 // pred_region
          %504 = dma.done %s496, 128
        $region68: #{tpu_custom_call.1} parent=55 // pred_fallthru
          _
        // Predicated region
        $region69: #{tpu_custom_call.1} parent=55 // pred_check
          %p505 = pneg %p149
        $region70: #{tpu_custom_call.1} parent=55 // pred_check_branch
          %507 = sbr.rel (%p505) target = $region72
        $region71: #{tpu_custom_call.1} parent=55 // pred_region
          %509 = dma.done [#allocation9], 512
        $region72: #{tpu_custom_call.1} parent=55 // pred_fallthru
          _
        // Predicated region
        $region73: #{tpu_custom_call.1} parent=55 // pred_check
          %p510 = pneg %p191
        $region74: #{tpu_custom_call.1} parent=55 // pred_check_branch
          %512 = sbr.rel (%p510) target = $region76
        $region75: #{tpu_custom_call.1} parent=55 // pred_region
          %514 = dma.done [#allocation9], 512
        $region76: #{tpu_custom_call.1} parent=55 // pred_fallthru
          _
        // Predicated region
        $region77: #{tpu_custom_call.1} parent=55 // pred_check
          %p515 = pneg %p233
        $region78: #{tpu_custom_call.1} parent=55 // pred_check_branch
          %517 = sbr.rel (%p515) target = $region80
        $region79: #{tpu_custom_call.1} parent=55 // pred_region
          %519 = dma.done [#allocation12], 512
        $region80: #{tpu_custom_call.1} parent=55 // pred_fallthru
          _
        %s520 = sand.u32 %s59, 1
        %s521 = scalar_lea.sflag [#allocation3], %s520
        %s522 = sand.u32 %s59, 1
        %s523 = smul.addr %s522, 8
        %s524 = scalar_lea.vmem [#allocation2], %s523
        %p525 = pneg %p72
        %p526 = pneg %p69
        %s527 = sand.u32 %s37, 1
        %s528 = scalar_lea.sflag [#allocation6], %s527
        %s529 = sand.u32 %s87, 1
        %s530 = smul.addr %s529, 8
        %s531 = scalar_lea.vmem [#allocation5], %s530
        %p532 = pneg %p100
        %p533 = pneg %p97
        %s534 = sand.u32 %s37, 1
        %s535 = scalar_lea.sflag [#allocation6], %s534
        %s536 = sand.u32 %s115, 1
        %s537 = smul.addr %s536, 8
        %s538 = scalar_lea.vmem [#allocation7], %s537
        %p539 = pneg %p128
        %p540 = pneg %p125
        %p541 = pneg %p149
        %p542 = pneg %p146
        %p543 = pneg %p170
        %p544 = pneg %p167
        %p545 = pneg %p191
        %p546 = pneg %p188
        %p547 = pneg %p212
        %p548 = pneg %p209
        %p549 = pneg %p233
        %p550 = pneg %p230
        %p551 = pneg %p254
        %p552 = pneg %p251
        %p553 = pneg %p282
        %p554 = pneg %p279
        %s555 = sand.u32 %s269, 1
        %s556 = scalar_lea.sflag [#allocation4], %s555
        %s557 = sand.u32 %s269, 1
        %s558 = smul.addr %s557, 8
        %s559 = scalar_lea.vmem [#allocation13], %s558
        %p560 = pneg %p310
        %p561 = pneg %p307
        %s562 = sand.u32 %s37, 1
        %s563 = scalar_lea.sflag [#allocation15], %s562
        %s564 = sand.u32 %s297, 1
        %s565 = smul.addr %s564, 8
        %s566 = scalar_lea.vmem [#allocation14], %s565
        %p567 = pneg %p338
        %p568 = pneg %p335
        %s569 = sand.u32 %s37, 1
        %s570 = scalar_lea.sflag [#allocation15], %s569
        %s571 = sand.u32 %s325, 1
        %s572 = smul.addr %s571, 8
        %s573 = scalar_lea.vmem [#allocation16], %s572
        %v574 = vld [vmem:[%s479] sm:$0xff]
        %v575 = vld [vmem:[#allocation8] sm:$0xff]
        %v576 = vld [vmem:[#allocation8 + $0x8] sm:$0xff]
        %v577 = vld [vmem:[#allocation8 + $0x10] sm:$0xff]
        %v578 = vld [vmem:[#allocation8 + $0x18] sm:$0xff]
        %v579 = vld [vmem:[%s4] sm:$0x1]
        %v581 = vperm.slane %v579, 0
        %vm583 = vcmask 261120
        %v585 = vsel %vm583, %v574, 0
        %587 = vmatpush.msra.mxu0 0.0
        %588 = vmatpush.msra.mxu0 0.0
        %589 = vmatpush.msra.mxu0 0.0
        %590 = vmatpush.msra.mxu0 0.0
        %591 = vmatpush.msra.mxu0 0.0
        %592 = vmatpush.msra.mxu0 0.0
        %593 = vmatpush.msra.mxu0 0.0
        %594 = vmatpush.msra.mxu0 0.0
        %595 = vmatpush.msra.mxu0 0.0
        %596 = vmatpush.msra.mxu0 0.0
        %597 = vmatpush.msra.mxu0 0.0
        %598 = vmatpush.msra.mxu0 0.0
        %599 = vmatpush.msra.mxu0 %v578
        %600 = vmatpush.msra.mxu0 %v577
        %601 = vmatpush.msra.mxu0 %v576
        %602 = vmatpush.msra.mxu0 %v575
        %603 = vmatmul.f32.gmra.mxu0 %v585
        %v604 = vpop.f32.mrf.mxu0
        %v605 = vadd.f32 %v581, %v604
        %606 = vdwg.mxu0
        %607 = vst.msk [vmem:[%s559] sm:$0xff] %vm583, %v605
        %v608 = vld [vmem:[%s489] sm:$0xff]
        %v609 = vld [vmem:[#allocation10] sm:$0xff]
        %v610 = vld [vmem:[#allocation10 + $0x8] sm:$0xff]
        %v611 = vld [vmem:[#allocation10 + $0x10] sm:$0xff]
        %v612 = vld [vmem:[#allocation10 + $0x18] sm:$0xff]
        %v613 = vld [vmem:[%s6] sm:$0x1]
        %v615 = vperm.slane %v613, 0
        %v618 = vsel %vm583, %v608, 0
        %620 = vmatpush.msra.mxu0 0.0
        %621 = vmatpush.msra.mxu0 0.0
        %622 = vmatpush.msra.mxu0 0.0
        %623 = vmatpush.msra.mxu0 0.0
        %624 = vmatpush.msra.mxu0 0.0
        %625 = vmatpush.msra.mxu0 0.0
        %626 = vmatpush.msra.mxu0 0.0
        %627 = vmatpush.msra.mxu0 0.0
        %628 = vmatpush.msra.mxu0 0.0
        %629 = vmatpush.msra.mxu0 0.0
        %630 = vmatpush.msra.mxu0 0.0
        %631 = vmatpush.msra.mxu0 0.0
        %632 = vmatpush.msra.mxu0 %v612
        %633 = vmatpush.msra.mxu0 %v611
        %634 = vmatpush.msra.mxu0 %v610
        %635 = vmatpush.msra.mxu0 %v609
        %636 = vmatmul.f32.gmra.mxu0 %v618
        %v637 = vpop.f32.mrf.mxu0
        %v638 = vadd.f32 %v615, %v637
        %639 = vdwg.mxu0
        %640 = vst.msk [vmem:[%s566] sm:$0xff] %vm583, %v638
        %v641 = vld [vmem:[%s499] sm:$0xff]
        %v642 = vld [vmem:[#allocation11] sm:$0xff]
        %v643 = vld [vmem:[#allocation11 + $0x8] sm:$0xff]
        %v644 = vld [vmem:[#allocation11 + $0x10] sm:$0xff]
        %v645 = vld [vmem:[#allocation11 + $0x18] sm:$0xff]
        %v646 = vld [vmem:[%s8] sm:$0x1]
        %v648 = vperm.slane %v646, 0
        %v651 = vsel %vm583, %v641, 0
        %653 = vmatpush.msra.mxu0 0.0
        %654 = vmatpush.msra.mxu0 0.0
        %655 = vmatpush.msra.mxu0 0.0
        %656 = vmatpush.msra.mxu0 0.0
        %657 = vmatpush.msra.mxu0 0.0
        %658 = vmatpush.msra.mxu0 0.0
        %659 = vmatpush.msra.mxu0 0.0
        %660 = vmatpush.msra.mxu0 0.0
        %661 = vmatpush.msra.mxu0 0.0
        %662 = vmatpush.msra.mxu0 0.0
        %663 = vmatpush.msra.mxu0 0.0
        %664 = vmatpush.msra.mxu0 0.0
        %665 = vmatpush.msra.mxu0 %v645
        %666 = vmatpush.msra.mxu0 %v644
        %667 = vmatpush.msra.mxu0 %v643
        %668 = vmatpush.msra.mxu0 %v642
        %669 = vmatmul.f32.gmra.mxu0 %v651
        %v670 = vpop.f32.mrf.mxu0
        %v671 = vadd.f32 %v648, %v670
        %672 = vdwg.mxu0
        %673 = vst.msk [vmem:[%s573] sm:$0xff] %vm583, %v671
        %s674 = sand.u32 %s269, 1
        %s675 = scalar_lea.sflag [#allocation4], %s674
        %s676 = sand.u32 %s269, 1
        %s677 = smul.addr %s676, 8
        %s678 = scalar_lea.vmem [#allocation13], %s677
        %s679 = sand.u32 %s37, 1
        %s680 = scalar_lea.sflag [#allocation15], %s679
        %s681 = sand.u32 %s297, 1
        %s682 = smul.addr %s681, 8
        %s683 = scalar_lea.vmem [#allocation14], %s682
        %s684 = sand.u32 %s37, 1
        %s685 = scalar_lea.sflag [#allocation15], %s684
        %s686 = sand.u32 %s325, 1
        %s687 = smul.addr %s686, 8
        %s688 = scalar_lea.vmem [#allocation16], %s687
        // Predicated region
        $region81: #{tpu_custom_call.1} parent=55 // pred_check
          %p689 = pneg %p279
        $region82: #{tpu_custom_call.1} parent=55 // pred_check_branch
          %691 = sbr.rel (%p689) target = $region84
        $region83: #{tpu_custom_call.1} parent=55 // pred_region
          %693 = vsyncadd %s675, 0
          %s694 = sadd.s32 %s42, %s41
          %s695 = smul.addr %s694, 8
          %s696 = scalar_lea.hbm %s9, %s695
          %s698 = sshll.u32 %s678, 4
          %s699 = int_to_ptr.vmem [resolvable:$true] %s698
          %s700 = sshll.u32 %s696, 4
          %s701 = int_to_ptr.hbm [resolvable:$true] %s700
          %703 = dma.vmem_to_hbm [thread:$0]  %s699, 128, %s701, %s675
        $region84: #{tpu_custom_call.1} parent=55 // pred_fallthru
          _
        // Predicated region
        $region85: #{tpu_custom_call.1} parent=55 // pred_check
          %p704 = pneg %p307
        $region86: #{tpu_custom_call.1} parent=55 // pred_check_branch
          %706 = sbr.rel (%p704) target = $region88
        $region87: #{tpu_custom_call.1} parent=55 // pred_region
          %708 = vsyncadd %s680, 0
          %s709 = sadd.s32 %s42, %s41
          %s710 = smul.addr %s709, 8
          %s711 = scalar_lea.hbm %s10, %s710
          %s713 = sshll.u32 %s683, 4
          %s714 = int_to_ptr.vmem [resolvable:$true] %s713
          %s715 = sshll.u32 %s711, 4
          %s716 = int_to_ptr.hbm [resolvable:$true] %s715
          %718 = dma.vmem_to_hbm [thread:$0]  %s714, 128, %s716, %s680
        $region88: #{tpu_custom_call.1} parent=55 // pred_fallthru
          _
        // Predicated region
        $region89: #{tpu_custom_call.1} parent=55 // pred_check
          %p719 = pneg %p335
        $region90: #{tpu_custom_call.1} parent=55 // pred_check_branch
          %721 = sbr.rel (%p719) target = $region92
        $region91: #{tpu_custom_call.1} parent=55 // pred_region
          %723 = vsyncadd %s685, 0
          %s724 = sadd.s32 %s42, %s41
          %s725 = smul.addr %s724, 8
          %s726 = scalar_lea.hbm %s11, %s725
          %s728 = sshll.u32 %s688, 4
          %s729 = int_to_ptr.vmem [resolvable:$true] %s728
          %s730 = sshll.u32 %s726, 4
          %s731 = int_to_ptr.hbm [resolvable:$true] %s730
          %733 = dma.vmem_to_hbm [thread:$0]  %s729, 128, %s731, %s685
        $region92: #{tpu_custom_call.1} parent=55 // pred_fallthru
          _
      $region56: #{tpu_custom_call.1} parent=5 // pred_fallthru
        _
      %p734 = scmp.le.s32.totalorder 2, %s32
      // Predicated region
      $region93: #{tpu_custom_call.1} parent=5 // pred_check
        %p735 = pneg %p734
      $region94: #{tpu_custom_call.1} parent=5 // pred_check_branch
        %737 = sbr.rel (%p735) target = $region96
      $region95: #{tpu_custom_call.1} parent=5 // pred_region
        %s738 = ssub.s32 %s32, 2
        // Predicated region
        $region97: #{tpu_custom_call.1} parent=95 // pred_check
          %p739 = pneg %p285
        $region98: #{tpu_custom_call.1} parent=95 // pred_check_branch
          %741 = sbr.rel (%p739) target = $region100
        $region99: #{tpu_custom_call.1} parent=95 // pred_region
          %s742 = sand.u32 %s270, 1
          %s743 = scalar_lea.sflag [#allocation4], %s742
          %s744 = sand.u32 %s270, 1
          %s745 = smul.addr %s744, 8
          %s746 = scalar_lea.vmem [#allocation13], %s745
          %748 = dma.done %s743, 128
        $region100: #{tpu_custom_call.1} parent=95 // pred_fallthru
          _
        // Predicated region
        $region101: #{tpu_custom_call.1} parent=95 // pred_check
          %p749 = pneg %p313
        $region102: #{tpu_custom_call.1} parent=95 // pred_check_branch
          %751 = sbr.rel (%p749) target = $region104
        $region103: #{tpu_custom_call.1} parent=95 // pred_region
          %s752 = sand.u32 %s38, 1
          %s753 = scalar_lea.sflag [#allocation15], %s752
          %s754 = sand.u32 %s298, 1
          %s755 = smul.addr %s754, 8
          %s756 = scalar_lea.vmem [#allocation14], %s755
          %758 = dma.done %s753, 128
        $region104: #{tpu_custom_call.1} parent=95 // pred_fallthru
          _
        // Predicated region
        $region105: #{tpu_custom_call.1} parent=95 // pred_check
          %p759 = pneg %p341
        $region106: #{tpu_custom_call.1} parent=95 // pred_check_branch
          %761 = sbr.rel (%p759) target = $region108
        $region107: #{tpu_custom_call.1} parent=95 // pred_region
          %s762 = sand.u32 %s38, 1
          %s763 = scalar_lea.sflag [#allocation15], %s762
          %s764 = sand.u32 %s326, 1
          %s765 = smul.addr %s764, 8
          %s766 = scalar_lea.vmem [#allocation16], %s765
          %768 = dma.done %s763, 128
        $region108: #{tpu_custom_call.1} parent=95 // pred_fallthru
          _
      $region96: #{tpu_custom_call.1} parent=5 // pred_fallthru
        _
    $region6: #{tpu_custom_call.1} parent=1 // loop_footer
      %s36 = sadd.s32 1, %s32
    $region7: #{tpu_custom_call.1} parent=1 // loop_footer_branch
      %31 = sbr.rel target = $region3
    $region8: #{tpu_custom_call.1} parent=1 // loop_exit
      _
    %769 = vsyncpa [#allocation3], 1
    %s770 = scalar_lea.sflag [#allocation3], 1
    %771 = vsyncpa %s770, 1
    %772 = vsyncpa [#allocation6], 1
    %s773 = scalar_lea.sflag [#allocation6], 1
    %774 = vsyncpa %s773, 1
    %775 = vsyncpa [#allocation9], 1
    %776 = vsyncpa [#allocation12], 1
    %777 = vsyncpa [#allocation4], 1
    %s778 = scalar_lea.sflag [#allocation4], 1
    %779 = vsyncpa %s778, 1
    %780 = vsyncpa [#allocation15], 1
    %s781 = scalar_lea.sflag [#allocation15], 1
    %782 = vsyncpa %s781, 1

</llo_original>
